<compile_context>
chip_gen: v5e
topology: v5e:2x2
jax: 0.10.0
libtpu: 0.0.40
codegen_flags: <defaults>
</compile_context>

<pallas_src>
import math
import functools

import numpy as np
import jax
import jax.numpy as jnp
from jax import lax
from jax.experimental import pallas as pl
from jax.experimental.pallas import tpu as pltpu


# -----------------------------------------------------------------------------
# Kernel: one grid step == one (batch, head); output block accumulated over heads.
# -----------------------------------------------------------------------------
def cross_attention_kernel(x_ref, cos_ref, sin_ref, k_ref, v_ref,
                           wq_ref, wqs_ref, wp_ref, o_ref,
                           *, scale: float, compute_dtype):
    h = pl.program_id(1)

    @pl.when(h == 0)
    def _init():
        o_ref[...] = jnp.zeros_like(o_ref)

    x = x_ref[0].astype(compute_dtype)                         # (Nq, D)

    # --- Q projection with interleaved-pair RoPE folded into the weights -----
    # wqs is wq with adjacent column pairs swapped, so x@wqs == pair-swap(x@wq):
    #   q_rot[2i]   = q[2i]  *cos_i - q[2i+1]*sin_i
    #   q_rot[2i+1] = q[2i+1]*cos_i + q[2i]  *sin_i
    q = jnp.dot(x, wq_ref[0].astype(compute_dtype),
                preferred_element_type=jnp.float32)            # (Nq, Dh) f32
    q_sw = jnp.dot(x, wqs_ref[0].astype(compute_dtype),
                   preferred_element_type=jnp.float32)
    q = q * cos_ref[...] + q_sw * sin_ref[...]                 # f32 elementwise

    # --- scaled-dot-product attention for this (batch, head) -----------------
    kh = k_ref[0, 0].astype(compute_dtype)                     # (Nkv, Dh)
    vh = v_ref[0, 0].astype(compute_dtype)                     # (Nkv, Dh)

    # contract last dims of q and k directly (no explicit k.T / XLU transpose)
    s = lax.dot_general(q.astype(compute_dtype), kh,
                        dimension_numbers=(((1,), (1,)), ((), ())),
                        preferred_element_type=jnp.float32) * scale   # (Nq, Nkv)
    m = jnp.max(s, axis=-1, keepdims=True)
    p = jnp.exp(s - m)
    l = jnp.sum(p, axis=-1, keepdims=True)
    p = p * pl.reciprocal(l, approx=True)

    oh = jnp.dot(p.astype(compute_dtype), vh,
                 preferred_element_type=jnp.float32)           # (Nq, Dh)

    # --- output projection: accumulate this head's slice of proj -------------
    o_ref[0] += jnp.dot(oh.astype(compute_dtype),
                        wp_ref[0].astype(compute_dtype),
                        preferred_element_type=jnp.float32).astype(o_ref.dtype)


# -----------------------------------------------------------------------------
# Wrapper: layout plumbing + weight prep only (no math hoisted out of the kernel).
# -----------------------------------------------------------------------------
def cross_attention(x, k, v, cos, sin, wq, wp, *, n_head, head_dim,
                    compute_dtype=jnp.bfloat16):
    B, Nq, D = x.shape
    _, Nkv, H, Dh = k.shape
    assert H == n_head and Dh == head_dim and D == n_head * head_dim
    assert head_dim % 2 == 0

    # k, v: (B, Nkv, H, Dh) -> (B, H, Nkv, Dh)   (mirrors the module's .transpose(1, 2))
    k_t = jnp.transpose(k, (0, 2, 1, 3)).astype(compute_dtype)
    v_t = jnp.transpose(v, (0, 2, 1, 3)).astype(compute_dtype)

    # to_q weight per head: (D, D) -> (H, D, Dh); plus an adjacent-pair-swapped copy
    # so RoPE becomes q*cos + q_swap*sin with no in-kernel lane permutes.
    wq_h = wq.reshape(D, H, Dh)
    wq_sw = wq_h.reshape(D, H, Dh // 2, 2)[..., ::-1].reshape(D, H, Dh)
    wq_h = jnp.transpose(wq_h, (1, 0, 2)).astype(compute_dtype)      # (H, D, Dh)
    wq_sw = jnp.transpose(wq_sw, (1, 0, 2)).astype(compute_dtype)    # (H, D, Dh)

    # proj weight rows per head: (D, D) -> (H, Dh, D)
    wp_h = wp.reshape(H, Dh, D).astype(compute_dtype)

    # RoPE tables expanded over interleaved pairs (f32, same for every head):
    #   cos2[:, 2i] = cos2[:, 2i+1] = cos_i ;  sin2[:, 2i] = -sin_i, sin2[:, 2i+1] = +sin_i
    cos2 = jnp.repeat(cos, 2, axis=-1).astype(jnp.float32)           # (Nq, Dh)
    sin2 = jnp.stack([-sin, sin], axis=-1).reshape(Nq, Dh).astype(jnp.float32)

    kernel = functools.partial(cross_attention_kernel,
                               scale=1.0 / math.sqrt(head_dim),
                               compute_dtype=compute_dtype)

    return pl.pallas_call(
        kernel,
        out_shape=jax.ShapeDtypeStruct((B, Nq, D), x.dtype),
        grid_spec=pltpu.PrefetchScalarGridSpec(
            num_scalar_prefetch=0,
            grid=(B, H),                                             # head axis last (accumulation)
            in_specs=[
                pl.BlockSpec((1, Nq, D), lambda b, h: (b, 0, 0)),        # x
                pl.BlockSpec((Nq, Dh), lambda b, h: (0, 0)),             # cos2
                pl.BlockSpec((Nq, Dh), lambda b, h: (0, 0)),             # sin2
                pl.BlockSpec((1, 1, Nkv, Dh), lambda b, h: (b, h, 0, 0)),  # k
                pl.BlockSpec((1, 1, Nkv, Dh), lambda b, h: (b, h, 0, 0)),  # v
                pl.BlockSpec((1, D, Dh), lambda b, h: (h, 0, 0)),        # Wq (per head)
                pl.BlockSpec((1, D, Dh), lambda b, h: (h, 0, 0)),        # Wq pair-swapped
                pl.BlockSpec((1, Dh, D), lambda b, h: (h, 0, 0)),        # Wproj (per head)
            ],
            out_specs=pl.BlockSpec((1, Nq, D), lambda b, h: (b, 0, 0)),  # accumulated over h
        ),
        compiler_params=pltpu.CompilerParams(
            dimension_semantics=("parallel", "arbitrary")),
    )(x, cos2, sin2, k_t, v_t, wq_h, wq_sw, wp_h)


# -----------------------------------------------------------------------------
# Pure-JAX f32 reference (mirrors the PyTorch eval forward) for correctness check.
# -----------------------------------------------------------------------------
def reference_forward(x, k, v, cos, sin, wq, wp, *, n_head, head_dim):
    B, Nq, D = x.shape
    q = x @ wq
    q = q.reshape(B, Nq, n_head, head_dim)
    qp = q.reshape(B, Nq, n_head, head_dim // 2, 2)
    c = cos[None, :, None, :]
    s = sin[None, :, None, :]
    q0 = qp[..., 0] * c - qp[..., 1] * s
    q1 = qp[..., 1] * c + qp[..., 0] * s
    q = jnp.stack([q0, q1], axis=-1).reshape(B, Nq, n_head, head_dim)
    qh = q.transpose(0, 2, 1, 3)                    # (B, H, Nq, Dh)
    kh = k.transpose(0, 2, 1, 3)                    # (B, H, Nkv, Dh)
    vh = v.transpose(0, 2, 1, 3)
    att = jnp.einsum("bhqd,bhkd->bhqk", qh, kh) / math.sqrt(head_dim)
    att = jax.nn.softmax(att, axis=-1)
    o = jnp.einsum("bhqk,bhkd->bhqd", att, vh)
    o = o.transpose(0, 2, 1, 3).reshape(B, Nq, D)
    return o @ wp


# -----------------------------------------------------------------------------
# Main
# -----------------------------------------------------------------------------
if __name__ == "__main__":
    B, Nq, Nkv = 2, 16, 32
    D, n_head, rope_base = 128, 4, 10000.0
    head_dim = D // n_head

    key = jax.random.PRNGKey(0)
    kx, kk, kv, kwq, kwp = jax.random.split(key, 5)
    std = 0.02
    x = jax.random.normal(kx, (B, Nq, D), jnp.float32)
    k = jax.random.normal(kk, (B, Nkv, n_head, head_dim), jnp.float32)
    v = jax.random.normal(kv, (B, Nkv, n_head, head_dim), jnp.float32)
    wq = std * jax.random.normal(kwq, (D, D), jnp.float32)   # to_q weight, (in, out)
    wp = std * jax.random.normal(kwp, (D, D), jnp.float32)   # proj weight, (in, out)

    # freqs_cis equivalent: per-position cos/sin for head_dim//2 frequencies
    half = head_dim // 2
    inv_freq = 1.0 / (rope_base ** (jnp.arange(half, dtype=jnp.float32) * 2.0 / head_dim))
    ang = jnp.outer(jnp.arange(Nq, dtype=jnp.float32), inv_freq)     # (Nq, half)
    cos, sin = jnp.cos(ang), jnp.sin(ang)

    out = cross_attention(x, k, v, cos, sin, wq, wp,
                          n_head=n_head, head_dim=head_dim,
                          compute_dtype=jnp.bfloat16)
    out = jax.block_until_ready(out)

    ref = reference_forward(x, k, v, cos, sin, wq, wp,
                            n_head=n_head, head_dim=head_dim)
    # bf16 matmul operands in the kernel (f32 accumulation) -> loosened tolerances;
    # with compute_dtype=jnp.float32 the kernel matches the reference to ~1e-5.
    np.testing.assert_allclose(np.asarray(out), np.asarray(ref), rtol=5e-2, atol=5e-3)
    print("KERNEL_OK")
</pallas_src>

<mosaic_0001>
module attributes {stable_mosaic.version = 11 : i64} {
  func.func @cross_attention_kernel(%arg0: i32, %arg1: i32, %arg2: memref<1x16x128xf32, #tpu.memory_space<vmem>>, %arg3: memref<16x32xf32, #tpu.memory_space<vmem>>, %arg4: memref<16x32xf32, #tpu.memory_space<vmem>>, %arg5: memref<1x1x32x32xbf16, #tpu.memory_space<vmem>>, %arg6: memref<1x1x32x32xbf16, #tpu.memory_space<vmem>>, %arg7: memref<1x128x32xbf16, #tpu.memory_space<vmem>>, %arg8: memref<1x128x32xbf16, #tpu.memory_space<vmem>>, %arg9: memref<1x32x128xbf16, #tpu.memory_space<vmem>>, %arg10: memref<1x16x128xf32, #tpu.memory_space<vmem>>) attributes {dimension_semantics = [#tpu.dimension_semantics<parallel>, #tpu.dimension_semantics<arbitrary>], iteration_bounds = array<i64: 2, 4>, scalar_prefetch = 0 : i64, scratch_operands = 0 : i64, tpu.core_type = #tpu.core_type<tc>, window_params = [{transform_indices = @transform_0, window_bounds = array<i64: 1, 16, 128>}, {pipeline_mode = #tpu.pipeline_mode<synchronous>, transform_indices = @transform_1, window_bounds = array<i64: 16, 32>}, {pipeline_mode = #tpu.pipeline_mode<synchronous>, transform_indices = @transform_2, window_bounds = array<i64: 16, 32>}, {transform_indices = @transform_3, window_bounds = array<i64: 1, 1, 32, 32>}, {transform_indices = @transform_4, window_bounds = array<i64: 1, 1, 32, 32>}, {transform_indices = @transform_5, window_bounds = array<i64: 1, 128, 32>}, {transform_indices = @transform_6, window_bounds = array<i64: 1, 128, 32>}, {transform_indices = @transform_7, window_bounds = array<i64: 1, 32, 128>}, {transform_indices = @transform_8, window_bounds = array<i64: 1, 16, 128>}]} {
    %c0_i32 = arith.constant 0 : i32
    %0 = arith.cmpi eq, %arg1, %c0_i32 : i32
    %1 = arith.extui %0 : i1 to i32
    %c0_i32_0 = arith.constant 0 : i32
    %2 = arith.cmpi ne, %1, %c0_i32_0 : i32
    scf.if %2 {
      %cst_37 = arith.constant 0.000000e+00 : f32
      %47 = vector.broadcast %cst_37 : f32 to vector<1x16x128xf32>
      %c0_38 = arith.constant 0 : index
      %c0_39 = arith.constant 0 : index
      %c0_40 = arith.constant 0 : index
      %48 = vector.load %arg10[%c0_38, %c0_39, %c0_40] : memref<1x16x128xf32, #tpu.memory_space<vmem>>, vector<1x16x128xf32>
      tpu.vector_store %arg10[%c0_38, %c0_39, %c0_40], %47 {strides = array<i32>} : memref<1x16x128xf32, #tpu.memory_space<vmem>>, vector<1x16x128xf32>,
    } else {
    }
    %c0 = arith.constant 0 : index
    %c0_1 = arith.constant 0 : index
    %c0_2 = arith.constant 0 : index
    %3 = vector.load %arg2[%c0, %c0_1, %c0_2] : memref<1x16x128xf32, #tpu.memory_space<vmem>>, vector<1x16x128xf32>
    %4 = vector.shape_cast %3 : vector<1x16x128xf32> to vector<16x128xf32>
    %5 = arith.truncf %4 : vector<16x128xf32> to vector<16x128xbf16>
    %c0_3 = arith.constant 0 : index
    %c0_4 = arith.constant 0 : index
    %c0_5 = arith.constant 0 : index
    %6 = vector.load %arg7[%c0_3, %c0_4, %c0_5] : memref<1x128x32xbf16, #tpu.memory_space<vmem>>, vector<1x128x32xbf16>
    %7 = vector.shape_cast %6 : vector<1x128x32xbf16> to vector<128x32xbf16>
    %cst = arith.constant dense<0.000000e+00> : vector<16x32xf32>
    %8 = tpu.matmul %5, %7, %cst {dimension_numbers = #tpu.dot_dimension_numbers<[1], [0], [0], [1], [0, 0, 1, 1], [], []>} : vector<16x128xbf16>, vector<128x32xbf16>, vector<16x32xf32> -> vector<16x32xf32>
    %c0_6 = arith.constant 0 : index
    %c0_7 = arith.constant 0 : index
    %c0_8 = arith.constant 0 : index
    %9 = vector.load %arg8[%c0_6, %c0_7, %c0_8] : memref<1x128x32xbf16, #tpu.memory_space<vmem>>, vector<1x128x32xbf16>
    %10 = vector.shape_cast %9 : vector<1x128x32xbf16> to vector<128x32xbf16>
    %cst_9 = arith.constant dense<0.000000e+00> : vector<16x32xf32>
    %11 = tpu.matmul %5, %10, %cst_9 {dimension_numbers = #tpu.dot_dimension_numbers<[1], [0], [0], [1], [0, 0, 1, 1], [], []>} : vector<16x128xbf16>, vector<128x32xbf16>, vector<16x32xf32> -> vector<16x32xf32>
    %c0_10 = arith.constant 0 : index
    %c0_11 = arith.constant 0 : index
    %12 = vector.load %arg3[%c0_10, %c0_11] : memref<16x32xf32, #tpu.memory_space<vmem>>, vector<16x32xf32>
    %13 = arith.mulf %8, %12 : vector<16x32xf32>
    %c0_12 = arith.constant 0 : index
    %c0_13 = arith.constant 0 : index
    %14 = vector.load %arg4[%c0_12, %c0_13] : memref<16x32xf32, #tpu.memory_space<vmem>>, vector<16x32xf32>
    %15 = arith.mulf %11, %14 : vector<16x32xf32>
    %16 = arith.addf %13, %15 : vector<16x32xf32>
    %c0_14 = arith.constant 0 : index
    %c0_15 = arith.constant 0 : index
    %c0_16 = arith.constant 0 : index
    %c0_17 = arith.constant 0 : index
    %17 = vector.load %arg5[%c0_14, %c0_15, %c0_16, %c0_17] : memref<1x1x32x32xbf16, #tpu.memory_space<vmem>>, vector<1x1x32x32xbf16>
    %18 = vector.shape_cast %17 : vector<1x1x32x32xbf16> to vector<32x32xbf16>
    %c0_18 = arith.constant 0 : index
    %c0_19 = arith.constant 0 : index
    %c0_20 = arith.constant 0 : index
    %c0_21 = arith.constant 0 : index
    %19 = vector.load %arg6[%c0_18, %c0_19, %c0_20, %c0_21] : memref<1x1x32x32xbf16, #tpu.memory_space<vmem>>, vector<1x1x32x32xbf16>
    %20 = vector.shape_cast %19 : vector<1x1x32x32xbf16> to vector<32x32xbf16>
    %21 = arith.truncf %16 : vector<16x32xf32> to vector<16x32xbf16>
    %cst_22 = arith.constant dense<0.000000e+00> : vector<16x32xf32>
    %22 = tpu.matmul %21, %18, %cst_22 {dimension_numbers = #tpu.dot_dimension_numbers<[1], [1], [0], [0], [0, 0, 1, 0], [], []>} : vector<16x32xbf16>, vector<32x32xbf16>, vector<16x32xf32> -> vector<16x32xf32>
    %cst_23 = arith.constant 0.176776692 : f32
    %23 = vector.broadcast %cst_23 : f32 to vector<16x32xf32>
    %24 = arith.mulf %22, %23 : vector<16x32xf32>
    %cst_24 = arith.constant dense<0xFF800000> : vector<16xf32>
    %25 = vector.multi_reduction <maximumf>, %24, %cst_24 [1] : vector<16x32xf32> to vector<16xf32>
    %26 = vector.shape_cast %25 : vector<16xf32> to vector<16x1xf32>
    %27 = vector.broadcast %26 : vector<16x1xf32> to vector<16x32xf32>
    %28 = arith.subf %24, %27 : vector<16x32xf32>
    %29 = math.exp %28 : vector<16x32xf32>
    %cst_25 = arith.constant dense<0.000000e+00> : vector<16xf32>
    %30 = vector.multi_reduction <add>, %29, %cst_25 [1] : vector<16x32xf32> to vector<16xf32>
    %31 = vector.shape_cast %30 : vector<16xf32> to vector<16x1xf32>
    %32 = tpu.reciprocal %31 {approx = true} : vector<16x1xf32> -> vector<16x1xf32>
    %33 = vector.broadcast %32 : vector<16x1xf32> to vector<16x32xf32>
    %34 = arith.mulf %29, %33 : vector<16x32xf32>
    %35 = arith.truncf %34 : vector<16x32xf32> to vector<16x32xbf16>
    %cst_26 = arith.constant dense<0.000000e+00> : vector<16x32xf32>
    %36 = tpu.matmul %35, %20, %cst_26 {dimension_numbers = #tpu.dot_dimension_numbers<[1], [0], [0], [1], [0, 0, 1, 1], [], []>} : vector<16x32xbf16>, vector<32x32xbf16>, vector<16x32xf32> -> vector<16x32xf32>
    %c0_27 = arith.constant 0 : index
    %c0_28 = arith.constant 0 : index
    %c0_29 = arith.constant 0 : index
    %37 = vector.load %arg10[%c0_27, %c0_28, %c0_29] : memref<1x16x128xf32, #tpu.memory_space<vmem>>, vector<1x16x128xf32>
    %38 = vector.shape_cast %37 : vector<1x16x128xf32> to vector<16x128xf32>
    %39 = arith.truncf %36 : vector<16x32xf32> to vector<16x32xbf16>
    %c0_30 = arith.constant 0 : index
    %c0_31 = arith.constant 0 : index
    %c0_32 = arith.constant 0 : index
    %40 = vector.load %arg9[%c0_30, %c0_31, %c0_32] : memref<1x32x128xbf16, #tpu.memory_space<vmem>>, vector<1x32x128xbf16>
    %41 = vector.shape_cast %40 : vector<1x32x128xbf16> to vector<32x128xbf16>
    %cst_33 = arith.constant dense<0.000000e+00> : vector<16x128xf32>
    %42 = tpu.matmul %39, %41, %cst_33 {dimension_numbers = #tpu.dot_dimension_numbers<[1], [0], [0], [1], [0, 0, 1, 1], [], []>} : vector<16x32xbf16>, vector<32x128xbf16>, vector<16x128xf32> -> vector<16x128xf32>
    %43 = arith.addf %38, %42 : vector<16x128xf32>
    %c0_34 = arith.constant 0 : index
    %c0_35 = arith.constant 0 : index
    %c0_36 = arith.constant 0 : index
    %44 = vector.load %arg10[%c0_34, %c0_35, %c0_36] : memref<1x16x128xf32, #tpu.memory_space<vmem>>, vector<1x16x128xf32>
    %45 = vector.shape_cast %44 : vector<1x16x128xf32> to vector<16x128xf32>
    %46 = vector.shape_cast %43 : vector<16x128xf32> to vector<1x16x128xf32>
    tpu.vector_store %arg10[%c0_34, %c0_35, %c0_36], %46 {strides = array<i32>} : memref<1x16x128xf32, #tpu.memory_space<vmem>>, vector<1x16x128xf32>,
    return
  }
  func.func @transform_0(%arg0: i32, %arg1: i32) -> (i32, i32, i32) {
    %c0_i32 = arith.constant 0 : i32
    %c0_i32_0 = arith.constant 0 : i32
    %c0_i32_1 = arith.constant 0 : i32
    return %arg0, %c0_i32, %c0_i32_0 : i32, i32, i32
  }
  func.func @transform_1(%arg0: i32, %arg1: i32) -> (i32, i32) {
    %c0_i32 = arith.constant 0 : i32
    %c0_i32_0 = arith.constant 0 : i32
    %c0_i32_1 = arith.constant 0 : i32
    return %c0_i32, %c0_i32_0 : i32, i32
  }
  func.func @transform_2(%arg0: i32, %arg1: i32) -> (i32, i32) {
    %c0_i32 = arith.constant 0 : i32
    %c0_i32_0 = arith.constant 0 : i32
    %c0_i32_1 = arith.constant 0 : i32
    return %c0_i32, %c0_i32_0 : i32, i32
  }
  func.func @transform_3(%arg0: i32, %arg1: i32) -> (i32, i32, i32, i32) {
    %c0_i32 = arith.constant 0 : i32
    %c0_i32_0 = arith.constant 0 : i32
    %c0_i32_1 = arith.constant 0 : i32
    return %arg0, %arg1, %c0_i32, %c0_i32_0 : i32, i32, i32, i32
  }
  func.func @transform_4(%arg0: i32, %arg1: i32) -> (i32, i32, i32, i32) {
    %c0_i32 = arith.constant 0 : i32
    %c0_i32_0 = arith.constant 0 : i32
    %c0_i32_1 = arith.constant 0 : i32
    return %arg0, %arg1, %c0_i32, %c0_i32_0 : i32, i32, i32, i32
  }
  func.func @transform_5(%arg0: i32, %arg1: i32) -> (i32, i32, i32) {
    %c0_i32 = arith.constant 0 : i32
    %c0_i32_0 = arith.constant 0 : i32
    %c0_i32_1 = arith.constant 0 : i32
    return %arg1, %c0_i32, %c0_i32_0 : i32, i32, i32
  }
  func.func @transform_6(%arg0: i32, %arg1: i32) -> (i32, i32, i32) {
    %c0_i32 = arith.constant 0 : i32
    %c0_i32_0 = arith.constant 0 : i32
    %c0_i32_1 = arith.constant 0 : i32
    return %arg1, %c0_i32, %c0_i32_0 : i32, i32, i32
  }
  func.func @transform_7(%arg0: i32, %arg1: i32) -> (i32, i32, i32) {
    %c0_i32 = arith.constant 0 : i32
    %c0_i32_0 = arith.constant 0 : i32
    %c0_i32_1 = arith.constant 0 : i32
    return %arg1, %c0_i32, %c0_i32_0 : i32, i32, i32
  }
  func.func @transform_8(%arg0: i32, %arg1: i32) -> (i32, i32, i32) {
    %c0_i32 = arith.constant 0 : i32
    %c0_i32_0 = arith.constant 0 : i32
    %c0_i32_1 = arith.constant 0 : i32
    return %arg0, %c0_i32, %c0_i32_0 : i32, i32, i32
  }
}

</mosaic_0001>

<llo_original>
// kernel: tpu_custom_call.1
$region0: #{tpu_custom_call.1}
  #allocation0 [shape = 'u32[]', space=smem, size = 0x4, offset = 0x4, fixed_abs, tag = 'smem constant byte address 0x4 - core index']
  #allocation1 [shape = 'u32[72,128]{1,0:T(1,128)}', space=vmem, size = 0x9000, scoped, tag = 'internal scratch']
  %s0 = inlined_call_operand.vmem [shape: f32[2,16,128], index: 0, kind: input, shape index: {}]
  %s1 = inlined_call_operand.vmem [shape: f32[16,32], index: 1, kind: input, shape index: {}]
  %s2 = inlined_call_operand.vmem [shape: f32[16,32], index: 2, kind: input, shape index: {}]
  %s3 = inlined_call_operand.vmem [shape: bf16[2,4,32,32], index: 3, kind: input, shape index: {}]
  %s4 = inlined_call_operand.vmem [shape: bf16[2,4,32,32], index: 4, kind: input, shape index: {}]
  %s5 = inlined_call_operand.vmem [shape: bf16[4,128,32], index: 5, kind: input, shape index: {}]
  %s6 = inlined_call_operand.vmem [shape: bf16[4,128,32], index: 6, kind: input, shape index: {}]
  %s7 = inlined_call_operand.vmem [shape: bf16[4,32,128], index: 7, kind: input, shape index: {}]
  %s8 = inlined_call_operand.hbm [shape: f32[2,16,128], index: 8, kind: output, shape index: {}]
  %s9 = sld [smem:[#allocation0]]
  $region69: #{tpu_custom_call.1} parent=0
    _
  %s11 = ssub.s32 1, %s9
  %s12 = scalar_select 0, %s11, %s9
  $region1: #{tpu_custom_call.1} parent=0
    #allocation2 [shape = 'u8[16384]{0}', space=vmem, size = 0x4000, scoped, tag = 'output window, operand 0']
    #allocation3 [shape = 's32[2]{0}', space=sflag, size = 0x8, scoped, tag = 'scoped memory for tpu_custom_call.1']
    %13 = vsyncpa [#allocation3], 0
    %s14 = scalar_lea.sflag [#allocation3], 1
    %15 = vsyncpa %s14, 0
    loop: start=0, step=1, limit=10
    $region2: #{tpu_custom_call.1} parent=1 // loop_pre_header
      _
    $region3: #{tpu_custom_call.1} parent=1 // loop_header
      %s17 = sphi 0, %s21
      %p18 = scmp.ge.s32.totalorder %s17, 10
      %s24 = sphi 0, %s36
      %s25 = sphi 0, %s32
      %s26 = sphi 0, %s24
      %s27 = sphi 0, %s25
      %s28 = sphi 0, %s26
      %s29 = sphi 0, %s27
      %s39 = sphi 0, %s41
      %s42 = sphi 0, %s39
      %s43 = sphi 0, %s42
      %s59 = sphi 0, %s43
      %s63 = sphi 0, %s63
      %s65 = sphi 0, %s63
      %s66 = sphi 0, %s65
      %s80 = sphi 0, %s66
      %s84 = sphi 0, %s84
      %s86 = sphi 0, %s84
      %s87 = sphi 0, %s86
      %s101 = sphi 0, %s87
      %s109 = sphi 0, %s111
      %s112 = sphi 0, %s109
      %s113 = sphi 0, %s112
      %s129 = sphi 0, %s113
      %s137 = sphi 0, %s139
      %s140 = sphi 0, %s137
      %s141 = sphi 0, %s140
      %s157 = sphi 0, %s141
      %s163 = sphi 0, %s165
      %s166 = sphi 0, %s163
      %s167 = sphi 0, %s166
      %s183 = sphi 0, %s167
      %s189 = sphi 0, %s191
      %s192 = sphi 0, %s189
      %s193 = sphi 0, %s192
      %s209 = sphi 0, %s193
      %s215 = sphi 0, %s217
      %s218 = sphi 0, %s215
      %s219 = sphi 0, %s218
      %s235 = sphi 0, %s219
      %s241 = sphi 0, %s243
      %s244 = sphi 0, %s241
      %s245 = sphi 0, %s244
      %s261 = sphi 0, %s245
    $region4: #{tpu_custom_call.1} parent=1 // loop_header_branch
      %20 = sbr.rel (%p18) target = $region8
    $region5: #{tpu_custom_call.1} parent=1 // loop_body
      %s22 = ssub.s32 %s17, 1
      %s23 = ssub.s32 %s17, 2
      %s30 = sadd.s32 1, %s25
      %p31 = scmp.ge.s32.totalorder %s30, 4
      %s32 = scalar_select %p31, 0, %s30
      %s33 = sadd.s32 1, %s24
      %s34 = scalar_select %p31, %s33, %s24
      %p35 = scmp.ge.s32.totalorder %s34, 2
      %s36 = scalar_select %p35, 0, %s34
      %s37 = ssub.s32 %s24, %s36
      %p38 = scmp.eq.s32.totalorder %s37, 0
      %s40 = sadd.s32 %s39, 1
      %s41 = scalar_select %p38, %s39, %s40
      %p44 = pneg %p38
      %p45 = scmp.eq.s32.totalorder %s17, 7
      %p46 = por %p44, %p45
      %p47 = scmp.ne.s32.totalorder %s39, %s42
      %p48 = scmp.eq.s32.totalorder %s17, 0
      %p49 = por %p47, %p48
      %p50 = scmp.ne.s32.totalorder %s39, %s42
      %p51 = scmp.eq.s32.totalorder %s22, 7
      %p52 = por %p50, %p51
      %p53 = scmp.ne.s32.totalorder %s42, %s43
      %p54 = scmp.eq.s32.totalorder %s22, 0
      %p55 = por %p53, %p54
      %p56 = scmp.ne.s32.totalorder %s42, %s43
      %p57 = scmp.eq.s32.totalorder %s23, 7
      %p58 = por %p56, %p57
      %p60 = scmp.ne.s32.totalorder %s43, %s59
      %p61 = scmp.eq.s32.totalorder %s23, 0
      %p62 = por %p60, %p61
      %s64 = sadd.s32 %s63, 1
      %p67 = scmp.eq.s32.totalorder %s17, 7
      %p68 = scmp.ne.s32.totalorder %s63, %s65
      %p69 = scmp.eq.s32.totalorder %s17, 0
      %p70 = por %p68, %p69
      %p71 = scmp.ne.s32.totalorder %s63, %s65
      %p72 = scmp.eq.s32.totalorder %s22, 7
      %p73 = por %p71, %p72
      %p74 = scmp.ne.s32.totalorder %s65, %s66
      %p75 = scmp.eq.s32.totalorder %s22, 0
      %p76 = por %p74, %p75
      %p77 = scmp.ne.s32.totalorder %s65, %s66
      %p78 = scmp.eq.s32.totalorder %s23, 7
      %p79 = por %p77, %p78
      %p81 = scmp.ne.s32.totalorder %s66, %s80
      %p82 = scmp.eq.s32.totalorder %s23, 0
      %p83 = por %p81, %p82
      %s85 = sadd.s32 %s84, 1
      %p88 = scmp.eq.s32.totalorder %s17, 7
      %p89 = scmp.ne.s32.totalorder %s84, %s86
      %p90 = scmp.eq.s32.totalorder %s17, 0
      %p91 = por %p89, %p90
      %p92 = scmp.ne.s32.totalorder %s84, %s86
      %p93 = scmp.eq.s32.totalorder %s22, 7
      %p94 = por %p92, %p93
      %p95 = scmp.ne.s32.totalorder %s86, %s87
      %p96 = scmp.eq.s32.totalorder %s22, 0
      %p97 = por %p95, %p96
      %p98 = scmp.ne.s32.totalorder %s86, %s87
      %p99 = scmp.eq.s32.totalorder %s23, 7
      %p100 = por %p98, %p99
      %p102 = scmp.ne.s32.totalorder %s87, %s101
      %p103 = scmp.eq.s32.totalorder %s23, 0
      %p104 = por %p102, %p103
      %s105 = ssub.s32 %s24, %s36
      %s106 = ssub.s32 %s25, %s32
      %s107 = sor.u32 %s105, %s106
      %p108 = scmp.eq.s32.totalorder %s107, 0
      %s110 = sadd.s32 %s109, 1
      %s111 = scalar_select %p108, %s109, %s110
      %p114 = pneg %p108
      %p115 = scmp.eq.s32.totalorder %s17, 7
      %p116 = por %p114, %p115
      %p117 = scmp.ne.s32.totalorder %s109, %s112
      %p118 = scmp.eq.s32.totalorder %s17, 0
      %p119 = por %p117, %p118
      %p120 = scmp.ne.s32.totalorder %s109, %s112
      %p121 = scmp.eq.s32.totalorder %s22, 7
      %p122 = por %p120, %p121
      %p123 = scmp.ne.s32.totalorder %s112, %s113
      %p124 = scmp.eq.s32.totalorder %s22, 0
      %p125 = por %p123, %p124
      %p126 = scmp.ne.s32.totalorder %s112, %s113
      %p127 = scmp.eq.s32.totalorder %s23, 7
      %p128 = por %p126, %p127
      %p130 = scmp.ne.s32.totalorder %s113, %s129
      %p131 = scmp.eq.s32.totalorder %s23, 0
      %p132 = por %p130, %p131
      %s133 = ssub.s32 %s24, %s36
      %s134 = ssub.s32 %s25, %s32
      %s135 = sor.u32 %s133, %s134
      %p136 = scmp.eq.s32.totalorder %s135, 0
      %s138 = sadd.s32 %s137, 1
      %s139 = scalar_select %p136, %s137, %s138
      %p142 = pneg %p136
      %p143 = scmp.eq.s32.totalorder %s17, 7
      %p144 = por %p142, %p143
      %p145 = scmp.ne.s32.totalorder %s137, %s140
      %p146 = scmp.eq.s32.totalorder %s17, 0
      %p147 = por %p145, %p146
      %p148 = scmp.ne.s32.totalorder %s137, %s140
      %p149 = scmp.eq.s32.totalorder %s22, 7
      %p150 = por %p148, %p149
      %p151 = scmp.ne.s32.totalorder %s140, %s141
      %p152 = scmp.eq.s32.totalorder %s22, 0
      %p153 = por %p151, %p152
      %p154 = scmp.ne.s32.totalorder %s140, %s141
      %p155 = scmp.eq.s32.totalorder %s23, 7
      %p156 = por %p154, %p155
      %p158 = scmp.ne.s32.totalorder %s141, %s157
      %p159 = scmp.eq.s32.totalorder %s23, 0
      %p160 = por %p158, %p159
      %s161 = ssub.s32 %s25, %s32
      %p162 = scmp.eq.s32.totalorder %s161, 0
      %s164 = sadd.s32 %s163, 1
      %s165 = scalar_select %p162, %s163, %s164
      %p168 = pneg %p162
      %p169 = scmp.eq.s32.totalorder %s17, 7
      %p170 = por %p168, %p169
      %p171 = scmp.ne.s32.totalorder %s163, %s166
      %p172 = scmp.eq.s32.totalorder %s17, 0
      %p173 = por %p171, %p172
      %p174 = scmp.ne.s32.totalorder %s163, %s166
      %p175 = scmp.eq.s32.totalorder %s22, 7
      %p176 = por %p174, %p175
      %p177 = scmp.ne.s32.totalorder %s166, %s167
      %p178 = scmp.eq.s32.totalorder %s22, 0
      %p179 = por %p177, %p178
      %p180 = scmp.ne.s32.totalorder %s166, %s167
      %p181 = scmp.eq.s32.totalorder %s23, 7
      %p182 = por %p180, %p181
      %p184 = scmp.ne.s32.totalorder %s167, %s183
      %p185 = scmp.eq.s32.totalorder %s23, 0
      %p186 = por %p184, %p185
      %s187 = ssub.s32 %s25, %s32
      %p188 = scmp.eq.s32.totalorder %s187, 0
      %s190 = sadd.s32 %s189, 1
      %s191 = scalar_select %p188, %s189, %s190
      %p194 = pneg %p188
      %p195 = scmp.eq.s32.totalorder %s17, 7
      %p196 = por %p194, %p195
      %p197 = scmp.ne.s32.totalorder %s189, %s192
      %p198 = scmp.eq.s32.totalorder %s17, 0
      %p199 = por %p197, %p198
      %p200 = scmp.ne.s32.totalorder %s189, %s192
      %p201 = scmp.eq.s32.totalorder %s22, 7
      %p202 = por %p200, %p201
      %p203 = scmp.ne.s32.totalorder %s192, %s193
      %p204 = scmp.eq.s32.totalorder %s22, 0
      %p205 = por %p203, %p204
      %p206 = scmp.ne.s32.totalorder %s192, %s193
      %p207 = scmp.eq.s32.totalorder %s23, 7
      %p208 = por %p206, %p207
      %p210 = scmp.ne.s32.totalorder %s193, %s209
      %p211 = scmp.eq.s32.totalorder %s23, 0
      %p212 = por %p210, %p211
      %s213 = ssub.s32 %s25, %s32
      %p214 = scmp.eq.s32.totalorder %s213, 0
      %s216 = sadd.s32 %s215, 1
      %s217 = scalar_select %p214, %s215, %s216
      %p220 = pneg %p214
      %p221 = scmp.eq.s32.totalorder %s17, 7
      %p222 = por %p220, %p221
      %p223 = scmp.ne.s32.totalorder %s215, %s218
      %p224 = scmp.eq.s32.totalorder %s17, 0
      %p225 = por %p223, %p224
      %p226 = scmp.ne.s32.totalorder %s215, %s218
      %p227 = scmp.eq.s32.totalorder %s22, 7
      %p228 = por %p226, %p227
      %p229 = scmp.ne.s32.totalorder %s218, %s219
      %p230 = scmp.eq.s32.totalorder %s22, 0
      %p231 = por %p229, %p230
      %p232 = scmp.ne.s32.totalorder %s218, %s219
      %p233 = scmp.eq.s32.totalorder %s23, 7
      %p234 = por %p232, %p233
      %p236 = scmp.ne.s32.totalorder %s219, %s235
      %p237 = scmp.eq.s32.totalorder %s23, 0
      %p238 = por %p236, %p237
      %s239 = ssub.s32 %s24, %s36
      %p240 = scmp.eq.s32.totalorder %s239, 0
      %s242 = sadd.s32 %s241, 1
      %s243 = scalar_select %p240, %s241, %s242
      %p246 = pneg %p240
      %p247 = scmp.eq.s32.totalorder %s17, 7
      %p248 = por %p246, %p247
      %p249 = scmp.ne.s32.totalorder %s241, %s244
      %p250 = scmp.eq.s32.totalorder %s17, 0
      %p251 = por %p249, %p250
      %p252 = scmp.ne.s32.totalorder %s241, %s244
      %p253 = scmp.eq.s32.totalorder %s22, 7
      %p254 = por %p252, %p253
      %p255 = scmp.ne.s32.totalorder %s244, %s245
      %p256 = scmp.eq.s32.totalorder %s22, 0
      %p257 = por %p255, %p256
      %p258 = scmp.ne.s32.totalorder %s244, %s245
      %p259 = scmp.eq.s32.totalorder %s23, 7
      %p260 = por %p258, %p259
      %p262 = scmp.ne.s32.totalorder %s245, %s261
      %p263 = scmp.eq.s32.totalorder %s23, 0
      %p264 = por %p262, %p263
      %p265 = scmp.le.s32.totalorder 1, %s17
      %p266 = scmp.lt.s32.totalorder %s17, 9
      %p267 = pnand %p265, %p266
      %p268 = pneg %p267
      // Predicated region
      $region9: #{tpu_custom_call.1} parent=5 // pred_check
        _
      $region10: #{tpu_custom_call.1} parent=5 // pred_check_branch
        %270 = sbr.rel (%p267) target = $region12
      $region11: #{tpu_custom_call.1} parent=5 // pred_region
        %s271 = ssub.s32 %s17, 1
        // Predicated region
        $region13: #{tpu_custom_call.1} parent=11 // pred_check
          %p272 = pneg %p76
        $region14: #{tpu_custom_call.1} parent=11 // pred_check_branch
          %274 = sbr.rel (%p272) target = $region16
        $region15: #{tpu_custom_call.1} parent=11 // pred_region
          _
        $region16: #{tpu_custom_call.1} parent=11 // pred_fallthru
          _
        // Predicated region
        $region17: #{tpu_custom_call.1} parent=11 // pred_check
          %p275 = pneg %p97
        $region18: #{tpu_custom_call.1} parent=11 // pred_check_branch
          %277 = sbr.rel (%p275) target = $region20
        $region19: #{tpu_custom_call.1} parent=11 // pred_region
          _
        $region20: #{tpu_custom_call.1} parent=11 // pred_fallthru
          _
      $region12: #{tpu_custom_call.1} parent=5 // pred_fallthru
        _
      %p278 = scmp.lt.s32.totalorder %s17, 8
      // Predicated region
      $region21: #{tpu_custom_call.1} parent=5 // pred_check
        %p279 = pneg %p278
      $region22: #{tpu_custom_call.1} parent=5 // pred_check_branch
        %281 = sbr.rel (%p279) target = $region24
      $region23: #{tpu_custom_call.1} parent=5 // pred_region
        // Predicated region
        $region25: #{tpu_custom_call.1} parent=23 // pred_check
          %p282 = pneg %p49
        $region26: #{tpu_custom_call.1} parent=23 // pred_check_branch
          %284 = sbr.rel (%p282) target = $region28
        $region27: #{tpu_custom_call.1} parent=23 // pred_region
          %p285 = scmp.lt.s32.totalorder %s24, 1
          %s286 = scalar_select %p285, %s24, 1
          %s287 = smul.addr %s286, 2
          %s288 = smul.addr %s287, 8
          %s289 = scalar_lea.vmem %s0, %s288
        $region28: #{tpu_custom_call.1} parent=23 // pred_fallthru
          _
        // Predicated region
        $region29: #{tpu_custom_call.1} parent=23 // pred_check
          %p290 = pneg %p119
        $region30: #{tpu_custom_call.1} parent=23 // pred_check_branch
          %292 = sbr.rel (%p290) target = $region32
        $region31: #{tpu_custom_call.1} parent=23 // pred_region
          %p293 = scmp.lt.s32.totalorder %s24, 1
          %s294 = scalar_select %p293, %s24, 1
          %p295 = scmp.lt.s32.totalorder %s25, 3
          %s296 = scalar_select %p295, %s25, 3
          %s297 = smul.addr %s296, 4
          %s298 = smul.addr %s294, 16
          %s299 = sadd.s32 %s297, %s298
          %s300 = smul.addr %s299, 4
          %s301 = scalar_lea.vmem %s3, %s300
        $region32: #{tpu_custom_call.1} parent=23 // pred_fallthru
          _
        // Predicated region
        $region33: #{tpu_custom_call.1} parent=23 // pred_check
          %p302 = pneg %p147
        $region34: #{tpu_custom_call.1} parent=23 // pred_check_branch
          %304 = sbr.rel (%p302) target = $region36
        $region35: #{tpu_custom_call.1} parent=23 // pred_region
          %p305 = scmp.lt.s32.totalorder %s24, 1
          %s306 = scalar_select %p305, %s24, 1
          %p307 = scmp.lt.s32.totalorder %s25, 3
          %s308 = scalar_select %p307, %s25, 3
          %s309 = smul.addr %s308, 4
          %s310 = smul.addr %s306, 16
          %s311 = sadd.s32 %s309, %s310
          %s312 = smul.addr %s311, 4
          %s313 = scalar_lea.vmem %s4, %s312
        $region36: #{tpu_custom_call.1} parent=23 // pred_fallthru
          _
        // Predicated region
        $region37: #{tpu_custom_call.1} parent=23 // pred_check
          %p314 = pneg %p173
        $region38: #{tpu_custom_call.1} parent=23 // pred_check_branch
          %316 = sbr.rel (%p314) target = $region40
        $region39: #{tpu_custom_call.1} parent=23 // pred_region
          %p317 = scmp.lt.s32.totalorder %s25, 3
          %s318 = scalar_select %p317, %s25, 3
          %s319 = smul.addr %s318, 16
          %s320 = smul.addr %s319, 4
          %s321 = scalar_lea.vmem %s5, %s320
        $region40: #{tpu_custom_call.1} parent=23 // pred_fallthru
          _
        // Predicated region
        $region41: #{tpu_custom_call.1} parent=23 // pred_check
          %p322 = pneg %p199
        $region42: #{tpu_custom_call.1} parent=23 // pred_check_branch
          %324 = sbr.rel (%p322) target = $region44
        $region43: #{tpu_custom_call.1} parent=23 // pred_region
          %p325 = scmp.lt.s32.totalorder %s25, 3
          %s326 = scalar_select %p325, %s25, 3
          %s327 = smul.addr %s326, 16
          %s328 = smul.addr %s327, 4
          %s329 = scalar_lea.vmem %s6, %s328
        $region44: #{tpu_custom_call.1} parent=23 // pred_fallthru
          _
        // Predicated region
        $region45: #{tpu_custom_call.1} parent=23 // pred_check
          %p330 = pneg %p225
        $region46: #{tpu_custom_call.1} parent=23 // pred_check_branch
          %332 = sbr.rel (%p330) target = $region48
        $region47: #{tpu_custom_call.1} parent=23 // pred_region
          %p333 = scmp.lt.s32.totalorder %s25, 3
          %s334 = scalar_select %p333, %s25, 3
          %s335 = smul.addr %s334, 4
          %s336 = smul.addr %s335, 4
          %s337 = scalar_lea.vmem %s7, %s336
        $region48: #{tpu_custom_call.1} parent=23 // pred_fallthru
          _
      $region24: #{tpu_custom_call.1} parent=5 // pred_fallthru
        _
      %p338 = scmp.le.s32.totalorder 1, %s17
      %p339 = scmp.lt.s32.totalorder %s17, 9
      %p340 = pnand %p338, %p339
      %p341 = pneg %p340
      // Predicated region
      $region49: #{tpu_custom_call.1} parent=5 // pred_check
        _
      $region50: #{tpu_custom_call.1} parent=5 // pred_check_branch
        %343 = sbr.rel (%p340) target = $region52
      $region51: #{tpu_custom_call.1} parent=5 // pred_region
        %s344 = ssub.s32 %s17, 1
        %p345 = scmp.lt.s32.totalorder %s26, 1
        %s346 = scalar_select %p345, %s26, 1
        %s347 = smul.addr %s346, 2
        %s348 = smul.addr %s347, 8
        %s349 = scalar_lea.vmem %s0, %s348
        %p350 = pneg %p55
        %p351 = pneg %p52
        %p352 = pneg %p76
        %p353 = pneg %p73
        %p354 = pneg %p97
        %p355 = pneg %p94
        %p356 = scmp.lt.s32.totalorder %s26, 1
        %s357 = scalar_select %p356, %s26, 1
        %p358 = scmp.lt.s32.totalorder %s27, 3
        %s359 = scalar_select %p358, %s27, 3
        %s360 = smul.addr %s359, 4
        %s361 = smul.addr %s357, 16
        %s362 = sadd.s32 %s360, %s361
        %s363 = smul.addr %s362, 4
        %s364 = scalar_lea.vmem %s3, %s363
        %p365 = pneg %p125
        %p366 = pneg %p122
        %p367 = scmp.lt.s32.totalorder %s26, 1
        %s368 = scalar_select %p367, %s26, 1
        %p369 = scmp.lt.s32.totalorder %s27, 3
        %s370 = scalar_select %p369, %s27, 3
        %s371 = smul.addr %s370, 4
        %s372 = smul.addr %s368, 16
        %s373 = sadd.s32 %s371, %s372
        %s374 = smul.addr %s373, 4
        %s375 = scalar_lea.vmem %s4, %s374
        %p376 = pneg %p153
        %p377 = pneg %p150
        %p378 = scmp.lt.s32.totalorder %s27, 3
        %s379 = scalar_select %p378, %s27, 3
        %s380 = smul.addr %s379, 16
        %s381 = smul.addr %s380, 4
        %s382 = scalar_lea.vmem %s5, %s381
        %p383 = pneg %p179
        %p384 = pneg %p176
        %p385 = scmp.lt.s32.totalorder %s27, 3
        %s386 = scalar_select %p385, %s27, 3
        %s387 = smul.addr %s386, 16
        %s388 = smul.addr %s387, 4
        %s389 = scalar_lea.vmem %s6, %s388
        %p390 = pneg %p205
        %p391 = pneg %p202
        %p392 = scmp.lt.s32.totalorder %s27, 3
        %s393 = scalar_select %p392, %s27, 3
        %s394 = smul.addr %s393, 4
        %s395 = smul.addr %s394, 4
        %s396 = scalar_lea.vmem %s7, %s395
        %p397 = pneg %p231
        %p398 = pneg %p228
        %p399 = pneg %p257
        %p400 = pneg %p254
        %s401 = sand.u32 %s244, 1
        %s402 = scalar_lea.sflag [#allocation3], %s401
        %s403 = sand.u32 %s244, 1
        %s404 = smul.addr %s403, 16
        %s405 = scalar_lea.vmem [#allocation2], %s404
        %p406 = scmp.lt.s32.totalorder %s26, 1
        %s407 = scalar_select %p406, %s26, 1
        %s408 = smul.addr %s407, 2
        %s409 = smul.addr %s408, 8
        %s410 = scalar_lea.vmem %s0, %s409
        %p411 = scmp.lt.s32.totalorder %s26, 1
        %s412 = scalar_select %p411, %s26, 1
        %p413 = scmp.lt.s32.totalorder %s27, 3
        %s414 = scalar_select %p413, %s27, 3
        %s415 = smul.addr %s414, 4
        %s416 = smul.addr %s412, 16
        %s417 = sadd.s32 %s415, %s416
        %s418 = smul.addr %s417, 4
        %s419 = scalar_lea.vmem %s3, %s418
        %p420 = scmp.lt.s32.totalorder %s26, 1
        %s421 = scalar_select %p420, %s26, 1
        %p422 = scmp.lt.s32.totalorder %s27, 3
        %s423 = scalar_select %p422, %s27, 3
        %s424 = smul.addr %s423, 4
        %s425 = smul.addr %s421, 16
        %s426 = sadd.s32 %s424, %s425
        %s427 = smul.addr %s426, 4
        %s428 = scalar_lea.vmem %s4, %s427
        %p429 = scmp.lt.s32.totalorder %s27, 3
        %s430 = scalar_select %p429, %s27, 3
        %s431 = smul.addr %s430, 16
        %s432 = smul.addr %s431, 4
        %s433 = scalar_lea.vmem %s5, %s432
        %p434 = scmp.lt.s32.totalorder %s27, 3
        %s435 = scalar_select %p434, %s27, 3
        %s436 = smul.addr %s435, 16
        %s437 = smul.addr %s436, 4
        %s438 = scalar_lea.vmem %s6, %s437
        %p439 = scmp.lt.s32.totalorder %s27, 3
        %s440 = scalar_select %p439, %s27, 3
        %s441 = smul.addr %s440, 4
        %s442 = smul.addr %s441, 4
        %s443 = scalar_lea.vmem %s7, %s442
        %p445 = scmp.eq.s32.totalorder %s27, 0
        // Predicated region
        $region53: #{tpu_custom_call.1} parent=51 // pred_check
          %p446 = pneg %p445
        $region54: #{tpu_custom_call.1} parent=51 // pred_check_branch
          %448 = sbr.rel (%p446) target = $region56
        $region55: #{tpu_custom_call.1} parent=51 // pred_region
          %449 = vst [vmem:[%s405] sm:$0xff] 0.0
          %450 = vst [vmem:[%s405 + $0x8] sm:$0xff] 0.0
        $region56: #{tpu_custom_call.1} parent=51 // pred_fallthru
          _
        %v451 = vld [vmem:[%s410] sm:$0xff]
        %v452 = vld [vmem:[%s410 + $0x8] sm:$0xff]
        %v453 = vpack.c.bf16 %v452, %v451
        %v454 = vld [vmem:[%s433] sm:$0xf]
        %v455 = vld [vmem:[%s433 + $0x4] sm:$0xf]
        %v456 = vld [vmem:[%s433 + $0x8] sm:$0xf]
        %v457 = vld [vmem:[%s433 + $0xc] sm:$0xf]
        %v458 = vld [vmem:[%s433 + $0x10] sm:$0xf]
        %v459 = vld [vmem:[%s433 + $0x14] sm:$0xf]
        %v460 = vld [vmem:[%s433 + $0x18] sm:$0xf]
        %v461 = vld [vmem:[%s433 + $0x1c] sm:$0xf]
        %v462 = vld [vmem:[%s433 + $0x20] sm:$0xf]
        %v463 = vld [vmem:[%s433 + $0x24] sm:$0xf]
        %v464 = vld [vmem:[%s433 + $0x28] sm:$0xf]
        %v465 = vld [vmem:[%s433 + $0x2c] sm:$0xf]
        %v466 = vld [vmem:[%s433 + $0x30] sm:$0xf]
        %v467 = vld [vmem:[%s433 + $0x34] sm:$0xf]
        %v468 = vld [vmem:[%s433 + $0x38] sm:$0xf]
        %v469 = vld [vmem:[%s433 + $0x3c] sm:$0xf]
        %v486 = vunpack.c.l.b16 %v454
        %v487 = vunpack.c.l.b16 %v455
        %v488 = vunpack.c.l.b16 %v456
        %v489 = vunpack.c.l.b16 %v457
        %v490 = vunpack.c.l.b16 %v458
        %v491 = vunpack.c.l.b16 %v459
        %v492 = vunpack.c.l.b16 %v460
        %v493 = vunpack.c.l.b16 %v461
        %v494 = vunpack.c.l.b16 %v462
        %v495 = vunpack.c.l.b16 %v463
        %v496 = vunpack.c.l.b16 %v464
        %v497 = vunpack.c.l.b16 %v465
        %v498 = vunpack.c.l.b16 %v466
        %v499 = vunpack.c.l.b16 %v467
        %v500 = vunpack.c.l.b16 %v468
        %v501 = vunpack.c.l.b16 %v469
        %v502 = vpack.c.b16 %v487, %v486
        %v503 = vpack.c.b16 %v489, %v488
        %v504 = vpack.c.b16 %v491, %v490
        %v505 = vpack.c.b16 %v493, %v492
        %v506 = vpack.c.b16 %v495, %v494
        %v507 = vpack.c.b16 %v497, %v496
        %v508 = vpack.c.b16 %v499, %v498
        %v509 = vpack.c.b16 %v501, %v500
        %518 = vmatpush.bf16.msra.mxu0 %v509
        %519 = vmatpush.bf16.msra.mxu0 %v508
        %520 = vmatpush.bf16.msra.mxu0 %v507
        %521 = vmatpush.bf16.msra.mxu0 %v506
        %522 = vmatpush.bf16.msra.mxu0 %v505
        %523 = vmatpush.bf16.msra.mxu0 %v504
        %524 = vmatpush.bf16.msra.mxu0 %v503
        %525 = vmatpush.bf16.msra.mxu0 %v502
        %526 = vmatmul.bf16.gmra.mxu0 %v453
        %v527 = vpop.f32.mrf.mxu0
        %v528 = vadd.f32 0.0, %v527
        %v529 = vpop.f32.mrf.mxu0
        %v530 = vadd.f32 0.0, %v529
        %531 = vdwg.mxu0
        %v532 = vld [vmem:[%s438] sm:$0xf]
        %v533 = vld [vmem:[%s438 + $0x4] sm:$0xf]
        %v534 = vld [vmem:[%s438 + $0x8] sm:$0xf]
        %v535 = vld [vmem:[%s438 + $0xc] sm:$0xf]
        %v536 = vld [vmem:[%s438 + $0x10] sm:$0xf]
        %v537 = vld [vmem:[%s438 + $0x14] sm:$0xf]
        %v538 = vld [vmem:[%s438 + $0x18] sm:$0xf]
        %v539 = vld [vmem:[%s438 + $0x1c] sm:$0xf]
        %v540 = vld [vmem:[%s438 + $0x20] sm:$0xf]
        %v541 = vld [vmem:[%s438 + $0x24] sm:$0xf]
        %v542 = vld [vmem:[%s438 + $0x28] sm:$0xf]
        %v543 = vld [vmem:[%s438 + $0x2c] sm:$0xf]
        %v544 = vld [vmem:[%s438 + $0x30] sm:$0xf]
        %v545 = vld [vmem:[%s438 + $0x34] sm:$0xf]
        %v546 = vld [vmem:[%s438 + $0x38] sm:$0xf]
        %v547 = vld [vmem:[%s438 + $0x3c] sm:$0xf]
        %v564 = vunpack.c.l.b16 %v532
        %v565 = vunpack.c.l.b16 %v533
        %v566 = vunpack.c.l.b16 %v534
        %v567 = vunpack.c.l.b16 %v535
        %v568 = vunpack.c.l.b16 %v536
        %v569 = vunpack.c.l.b16 %v537
        %v570 = vunpack.c.l.b16 %v538
        %v571 = vunpack.c.l.b16 %v539
        %v572 = vunpack.c.l.b16 %v540
        %v573 = vunpack.c.l.b16 %v541
        %v574 = vunpack.c.l.b16 %v542
        %v575 = vunpack.c.l.b16 %v543
        %v576 = vunpack.c.l.b16 %v544
        %v577 = vunpack.c.l.b16 %v545
        %v578 = vunpack.c.l.b16 %v546
        %v579 = vunpack.c.l.b16 %v547
        %v580 = vpack.c.b16 %v565, %v564
        %v581 = vpack.c.b16 %v567, %v566
        %v582 = vpack.c.b16 %v569, %v568
        %v583 = vpack.c.b16 %v571, %v570
        %v584 = vpack.c.b16 %v573, %v572
        %v585 = vpack.c.b16 %v575, %v574
        %v586 = vpack.c.b16 %v577, %v576
        %v587 = vpack.c.b16 %v579, %v578
        %596 = vmatpush.bf16.msra.mxu0 %v587
        %597 = vmatpush.bf16.msra.mxu0 %v586
        %598 = vmatpush.bf16.msra.mxu0 %v585
        %599 = vmatpush.bf16.msra.mxu0 %v584
        %600 = vmatpush.bf16.msra.mxu0 %v583
        %601 = vmatpush.bf16.msra.mxu0 %v582
        %602 = vmatpush.bf16.msra.mxu0 %v581
        %603 = vmatpush.bf16.msra.mxu0 %v580
        %604 = vmatmul.bf16.gmra.mxu0 %v453
        %v605 = vpop.f32.mrf.mxu0
        %v606 = vadd.f32 0.0, %v605
        %v607 = vpop.f32.mrf.mxu0
        %v608 = vadd.f32 0.0, %v607
        %609 = vdwg.mxu0
        %v610 = vld [vmem:[%s1] sm:$0xff]
        %v611 = vld [vmem:[%s1 + $0x8] sm:$0xff]
        %v612 = vmul.f32 %v528, %v610
        %v613 = vmul.f32 %v530, %v611
        %v614 = vld [vmem:[%s2] sm:$0xff]
        %v615 = vld [vmem:[%s2 + $0x8] sm:$0xff]
        %v616 = vmul.f32 %v606, %v614
        %v617 = vmul.f32 %v608, %v615
        %v618 = vadd.f32 %v612, %v616
        %v619 = vadd.f32 %v613, %v617
        %v620 = vld [vmem:[%s419] sm:$0xf]
        %v621 = vld [vmem:[%s419 + $0x4] sm:$0xf]
        %v622 = vld [vmem:[%s419 + $0x8] sm:$0xf]
        %v623 = vld [vmem:[%s419 + $0xc] sm:$0xf]
        %v624 = vld [vmem:[%s428] sm:$0xf]
        %v625 = vld [vmem:[%s428 + $0x4] sm:$0xf]
        %v626 = vld [vmem:[%s428 + $0x8] sm:$0xf]
        %v627 = vld [vmem:[%s428 + $0xc] sm:$0xf]
        %v628 = vpack.c.bf16 %v619, %v618
        %v633 = vunpack.c.l.b16 %v620
        %v634 = vunpack.c.l.b16 %v621
        %v635 = vunpack.c.l.b16 %v622
        %v636 = vunpack.c.l.b16 %v623
        %v637 = vpack.c.b16 %v634, %v633
        %v638 = vpack.c.b16 %v636, %v635
        %vm639 = vcmask 261120
        %v641 = vsel %vm639, %v628, 0
        %v644 = vsel %vm639, %v637, 0
        %v647 = vsel %vm639, %v638, 0
        %649 = vmatpush.bf16.xpose.msra.mxu0 0
        %650 = vmatpush.bf16.xpose.msra.mxu0 0
        %651 = vmatpush.bf16.xpose.msra.mxu0 0
        %652 = vmatpush.bf16.xpose.msra.mxu0 0
        %653 = vmatpush.bf16.xpose.msra.mxu0 0
        %654 = vmatpush.bf16.xpose.msra.mxu0 0
        %655 = vmatpush.bf16.xpose.msra.mxu0 %v647
        %656 = vmatpush.bf16.xpose.msra.mxu0 %v644
        %657 = vmatmul.bf16.gmra.mxu0 %v641
        %v658 = vpop.f32.mrf.mxu0
        %v659 = vadd.f32 0.0, %v658
        %v660 = vpop.f32.mrf.mxu0
        %v661 = vadd.f32 0.0, %v660
        %662 = vdwg.mxu0
        %v663 = vmul.f32 %v659, 0.17677669
        %v664 = vmul.f32 %v661, 0.17677669
        %v665 = vsel %vm639, %v663, -inf
        %666 = vmax.xlane.f32.xlu0 %v665
        %v667 = vpop.xlane.xlu0 %666
        %v668 = vsel %vm639, %v664, -inf
        %669 = vmax.xlane.f32.xlu0 %v668
        %v670 = vpop.xlane.xlu0 %669
        %v671 = vsub.f32 %v663, %v667
        %v672 = vsub.f32 %v664, %v670
        %v673 = vmul.f32 %v671, 1.442695
        %v674 = vpow.pop %v673
        %v675 = vmul.f32 %v672, 1.442695
        %v676 = vpow.pop %v675
        %v677 = vsel %vm639, %v674, 0.0
        %678 = vadd.xlane.f32.xlu0 %v677
        %v679 = vpop.xlane.xlu0 %678
        %v680 = vsel %vm639, %v676, 0.0
        %681 = vadd.xlane.f32.xlu0 %v680
        %v682 = vpop.xlane.xlu0 %681
        %v683 = vrcp.pop %v679
        %v684 = vrcp.pop %v682
        %v685 = vmul.f32 %v674, %v683
        %v686 = vmul.f32 %v676, %v684
        %v687 = vpack.c.bf16 %v686, %v685
        %v692 = vunpack.c.l.b16 %v624
        %v693 = vunpack.c.l.b16 %v625
        %v694 = vunpack.c.l.b16 %v626
        %v695 = vunpack.c.l.b16 %v627
        %v696 = vpack.c.b16 %v693, %v692
        %v697 = vpack.c.b16 %v695, %v694
        %v701 = vsel %vm639, %v687, 0
        %703 = vmatpush.bf16.msra.mxu0 0
        %704 = vmatpush.bf16.msra.mxu0 0
        %705 = vmatpush.bf16.msra.mxu0 0
        %706 = vmatpush.bf16.msra.mxu0 0
        %707 = vmatpush.bf16.msra.mxu0 0
        %708 = vmatpush.bf16.msra.mxu0 0
        %709 = vmatpush.bf16.msra.mxu0 %v697
        %710 = vmatpush.bf16.msra.mxu0 %v696
        %711 = vmatmul.bf16.gmra.mxu0 %v701
        %v712 = vpop.f32.mrf.mxu0
        %v713 = vadd.f32 0.0, %v712
        %v714 = vpop.f32.mrf.mxu0
        %v715 = vadd.f32 0.0, %v714
        %716 = vdwg.mxu0
        %v717 = vld [vmem:[%s405] sm:$0xff]
        %v718 = vld [vmem:[%s405 + $0x8] sm:$0xff]
        %v719 = vpack.c.bf16 %v715, %v713
        %v720 = vld [vmem:[%s443] sm:$0xf]
        %v721 = vld [vmem:[%s443 + $0x4] sm:$0xf]
        %v722 = vld [vmem:[%s443 + $0x8] sm:$0xf]
        %v723 = vld [vmem:[%s443 + $0xc] sm:$0xf]
        %v728 = vunpack.c.l.b16 %v720
        %v729 = vunpack.c.l.b16 %v721
        %v730 = vunpack.c.l.b16 %v722
        %v731 = vunpack.c.l.b16 %v723
        %v732 = vpack.c.b16 %v729, %v728
        %v733 = vpack.c.b16 %v731, %v730
        %v737 = vsel %vm639, %v719, 0
        %739 = vmatpush.bf16.msra.mxu0 0
        %740 = vmatpush.bf16.msra.mxu0 0
        %741 = vmatpush.bf16.msra.mxu0 0
        %742 = vmatpush.bf16.msra.mxu0 0
        %743 = vmatpush.bf16.msra.mxu0 0
        %744 = vmatpush.bf16.msra.mxu0 0
        %745 = vmatpush.bf16.msra.mxu0 %v733
        %746 = vmatpush.bf16.msra.mxu0 %v732
        %747 = vmatmul.bf16.gmra.mxu0 %v737
        %v748 = vpop.f32.mrf.mxu0
        %v749 = vadd.f32 0.0, %v748
        %v750 = vpop.f32.mrf.mxu0
        %v751 = vadd.f32 0.0, %v750
        %752 = vdwg.mxu0
        %v753 = vadd.f32 %v717, %v749
        %v754 = vadd.f32 %v718, %v751
        %755 = vst [vmem:[%s405] sm:$0xff] %v753
        %756 = vst [vmem:[%s405 + $0x8] sm:$0xff] %v754
        %s757 = sand.u32 %s244, 1
        %s758 = scalar_lea.sflag [#allocation3], %s757
        %s759 = sand.u32 %s244, 1
        %s760 = smul.addr %s759, 16
        %s761 = scalar_lea.vmem [#allocation2], %s760
        // Predicated region
        $region57: #{tpu_custom_call.1} parent=51 // pred_check
          %p762 = pneg %p254
        $region58: #{tpu_custom_call.1} parent=51 // pred_check_branch
          %764 = sbr.rel (%p762) target = $region60
        $region59: #{tpu_custom_call.1} parent=51 // pred_region
          %766 = vsyncadd %s758, 0
          %s767 = smul.addr %s26, 2
          %s768 = smul.addr %s767, 8
          %s769 = scalar_lea.hbm %s8, %s768
          %s770 = sshll.u32 %s761, 4
          %s771 = int_to_ptr.vmem [resolvable:$true] %s770
          %s772 = sshll.u32 %s769, 4
          %s773 = int_to_ptr.hbm [resolvable:$true] %s772
          %778 = dma.vmem_to_hbm [thread:$0]  %s771, 256, %s773, %s758, 128, 128, 8
        $region60: #{tpu_custom_call.1} parent=51 // pred_fallthru
          _
      $region52: #{tpu_custom_call.1} parent=5 // pred_fallthru
        _
      %p779 = scmp.le.s32.totalorder 2, %s17
      // Predicated region
      $region61: #{tpu_custom_call.1} parent=5 // pred_check
        %p780 = pneg %p779
      $region62: #{tpu_custom_call.1} parent=5 // pred_check_branch
        %782 = sbr.rel (%p780) target = $region64
      $region63: #{tpu_custom_call.1} parent=5 // pred_region
        %s783 = ssub.s32 %s17, 2
        // Predicated region
        $region65: #{tpu_custom_call.1} parent=63 // pred_check
          %p784 = pneg %p260
        $region66: #{tpu_custom_call.1} parent=63 // pred_check_branch
          %786 = sbr.rel (%p784) target = $region68
        $region67: #{tpu_custom_call.1} parent=63 // pred_region
          %s787 = sand.u32 %s245, 1
          %s788 = scalar_lea.sflag [#allocation3], %s787
          %s789 = sand.u32 %s245, 1
          %s790 = smul.addr %s789, 16
          %s791 = scalar_lea.vmem [#allocation2], %s790
          %793 = dma.done %s788, 256
        $region68: #{tpu_custom_call.1} parent=63 // pred_fallthru
          _
      $region64: #{tpu_custom_call.1} parent=5 // pred_fallthru
        _
    $region6: #{tpu_custom_call.1} parent=1 // loop_footer
      %s21 = sadd.s32 1, %s17
    $region7: #{tpu_custom_call.1} parent=1 // loop_footer_branch
      %16 = sbr.rel target = $region3
    $region8: #{tpu_custom_call.1} parent=1 // loop_exit
      _
    %794 = vsyncpa [#allocation3], 1
    %s795 = scalar_lea.sflag [#allocation3], 1
    %796 = vsyncpa %s795, 1

</llo_original>
